<compile_context>
chip_gen: v7x
topology: tpu7x:2x2x1
jax: 0.10.0
libtpu: 0.0.40
codegen_flags: <defaults>
</compile_context>

<pallas_src>
import functools

import jax
import jax.numpy as jnp
from jax.experimental import pallas as pl
from jax.experimental.pallas import tpu as pltpu

PAD_TOKEN_ID = 0          # deterministic stand-in for item_tokenizer.pad_token_id
_MAX_ROW_TILE = 2048      # cap on rows per grid step
_PER_BUFFER_CAP = 6 * 1024 * 1024   # ~6 MiB per logits DMA buffer is enough


def _round_up(x, m):
    return -(-x // m) * m


def _choose_tiling(n_rows, vocab, itemsize):
    """Pick rows-per-grid-step and a VMEM limit from the detected TPU generation."""
    try:
        vmem_cap = int(pltpu.get_tpu_info().vmem_capacity_bytes)
    except Exception:
        vmem_cap = 64 * 1024 * 1024   # conservative fallback (v7x per-core VMEM)

    # sublane packing granularity of the logits dtype (f32: 8, bf16: 16, int8: 32)
    gran = max(8, 32 // max(1, itemsize))

    vocab_lanes = _round_up(vocab, 128)
    # per-row VMEM estimate:
    #   2x double-buffered logits tile (native dtype)
    # + ~5 f32 tile-sized compute temporaries (shifted / exp / one-hot select /
    #   compare mask / slack)  -- honest count, matters on v7x's 64 MiB
    # + 2x double-buffered (rows, 1) int32 target tile (lane-padded to 128);
    #   included explicitly because for small vocab (<=512) it is a
    #   non-trivial fraction of the per-row budget.
    bytes_per_row = (2 * vocab_lanes * itemsize
                     + 5 * vocab_lanes * 4
                     + 2 * 128 * 4)

    budget = vmem_cap // 2                                   # conservative
    tile_from_budget = budget // bytes_per_row
    tile_from_cap = _PER_BUFFER_CAP // max(1, vocab_lanes * itemsize)
    tile = min(tile_from_budget, tile_from_cap, _MAX_ROW_TILE)
    tile = max(gran, (tile // gran) * gran)

    n_ceil = _round_up(max(1, n_rows), gran)
    # keep at least 2 blocks when there is enough work so that the 'parallel'
    # grid axis can be split across both TensorCores on v7x (no-op on v5e/v6e).
    if n_ceil > 2 * gran:
        half = _round_up(-(-n_ceil // 2), gran)
        tile = min(tile, max(gran, half))
    tile = min(tile, n_ceil)
    tile = max(gran, (tile // gran) * gran)

    # explicit VMEM limit: computed need + margin (NOT 0.85 * capacity), so we
    # never starve surrounding XLA fusions (important on v5e's 16 MiB default).
    need = tile * bytes_per_row + (1 << 20)
    vmem_limit = int(min(vmem_cap, max(2 * need, 16 * 1024 * 1024)))
    return int(tile), vmem_limit


def _ce_partial_kernel(tgt_ref, logits_ref, out_ref, *, pad_token_id):
    """One row-tile: write an (8,128) partial block.

    lane 0 = sum over rows of masked cross_entropy, lane 1 = count of valid
    rows (both broadcast over the 8 sublanes; the common factor cancels when
    the wrapper divides sum by count).  Rows whose target == pad_token_id
    (including the padded tail rows of the last partial block, whose logits
    are undefined) are excluded via jnp.where, so garbage/NaN cannot leak.
    """
    logits = logits_ref[...]                                  # (TM, V) native dtype
    tgt = tgt_ref[...]                                        # (TM, 1) int32
    vocab = logits.shape[-1]

    # row max on the native tile (exact for max); upcast only the (TM,1) result
    row_max = jnp.max(logits, axis=-1, keepdims=True).astype(jnp.float32)

    # numerically stable softmax denominator; the subtraction promotes to f32,
    # no explicit full-tile upcast copy
    shifted = logits - row_max                                # (TM, V) f32
    sumexp = jnp.sum(jnp.exp(shifted), axis=-1, keepdims=True)    # (TM, 1) f32

    # one-hot gather of the target logit on the native tile; (1, V) iota is
    # broadcast by the compare (no materialized (TM, V) int32), accumulation
    # in f32 (exact: one nonzero per row)
    col = jax.lax.broadcasted_iota(jnp.int32, (1, vocab), 1)      # (1, V)
    onehot = col == tgt                                            # (TM, V) bool
    tgt_logit = jnp.sum(jnp.where(onehot, logits, 0),
                        axis=-1, keepdims=True, dtype=jnp.float32)  # (TM, 1)
    tgt_shifted = tgt_logit - row_max                              # (TM, 1)

    loss = jnp.log(sumexp) - tgt_shifted                           # (TM, 1)
    valid = tgt != pad_token_id                                    # (TM, 1) bool

    loss_sum = jnp.sum(jnp.where(valid, loss, 0.0))                # scalar
    valid_cnt = jnp.sum(valid.astype(jnp.float32))                 # scalar

    lane = jax.lax.broadcasted_iota(jnp.int32, out_ref.shape, 1)
    out_ref[...] = jnp.where(lane == 0, loss_sum,
                             jnp.where(lane == 1, valid_cnt, 0.0))


def _ce_pallas(targets_2d, logits_2d, pad_token_id, row_tile, vmem_limit_bytes):
    n, vocab = logits_2d.shape
    num_blocks = pl.cdiv(n, row_tile)
    assert targets_2d.shape[0] == num_blocks * row_tile
    kernel = functools.partial(_ce_partial_kernel, pad_token_id=pad_token_id)

    partials = pl.pallas_call(
        kernel,
        out_shape=jax.ShapeDtypeStruct((num_blocks * 8, 128), jnp.float32),
        grid_spec=pltpu.PrefetchScalarGridSpec(
            num_scalar_prefetch=0,
            grid=(num_blocks,),
            in_specs=[
                pl.BlockSpec((row_tile, 1), lambda i: (i, 0)),      # targets (padded)
                pl.BlockSpec((row_tile, vocab), lambda i: (i, 0)),  # logits (native, unpadded)
            ],
            out_specs=pl.BlockSpec((8, 128), lambda i: (i, 0)),
        ),
        compiler_params=pltpu.CompilerParams(
            dimension_semantics=("parallel",),
            vmem_limit_bytes=vmem_limit_bytes),
    )(targets_2d, logits_2d)

    totals = jnp.sum(partials, axis=0)        # (128,); x8 sublane factor cancels
    # NOTE: if every target equals pad_token_id this divides by zero (NaN),
    # matching F.cross_entropy's 'mean' reduction with all targets ignored.
    # NOTE: out-of-range target indices (>= vocab) produce a finite (wrong)
    # loss instead of raising, unlike PyTorch.
    return totals[0] / totals[1]


def single_target_cross_entropy_loss(target, logits, pad_token_id=PAD_TOKEN_ID):
    """Forward pass of SingleTargetCrossEntropyLoss.

    target: [BS] or [BS, S] int; logits: [BS, I] or [BS, S, I] float.
    Returns scalar mean CE over non-pad targets (F.cross_entropy default
    'mean' reduction with ignore_index=pad_token_id).
    """
    if target.ndim == 1 and logits.ndim == 2:
        t = target
        lg = logits
    elif target.ndim == 2 and logits.ndim == 3:
        if logits.shape[1] != target.shape[1]:
            raise Exception(
                f"Number of sequence elements must be equal for logits and "
                f"targets. logits: {logits.shape}, targets: {target.shape}")
        lg = jnp.reshape(logits, (-1, logits.shape[2]))
        t = jnp.reshape(target, (-1,))
    else:
        raise Exception(
            f"This loss can not be applied to logits and targets with these "
            f"dimensions: logits: {logits.shape}, target: {target.shape}")

    n, vocab = lg.shape
    itemsize = jnp.dtype(lg.dtype).itemsize
    row_tile, vmem_limit = _choose_tiling(n, vocab, itemsize)
    num_blocks = pl.cdiv(n, row_tile)
    n_padded = num_blocks * row_tile

    # Only the tiny targets array is padded (padded rows -> pad_token_id, i.e.
    # ignored); the big logits array streams unpadded and the kernel masks the
    # tail rows of the last partial block.
    t2 = t.astype(jnp.int32)
    if n_padded != n:
        t2 = jnp.pad(t2, (0, n_padded - n), constant_values=pad_token_id)
    t2 = t2.reshape(-1, 1)

    return _ce_pallas(t2, lg, pad_token_id, row_tile, vmem_limit)


def _reference_loss(target, logits, pad_token_id=PAD_TOKEN_ID):
    if target.ndim == 2:
        logits = logits.reshape(-1, logits.shape[-1])
        target = target.reshape(-1)
    logp = jax.nn.log_softmax(logits.astype(jnp.float32), axis=-1)
    per_row = -jnp.take_along_axis(logp, target[:, None].astype(jnp.int32),
                                   axis=-1)[:, 0]
    valid = (target != pad_token_id).astype(jnp.float32)
    return jnp.sum(per_row * valid) / jnp.sum(valid)


if __name__ == "__main__":
    key = jax.random.PRNGKey(0)
    k1, k2, k3, k4, k5, k6, k7, k8 = jax.random.split(key, 8)

    BS, S, I = 4, 8, 128

    # case 1: single target per sequence -> target [BS], logits [BS, I]
    # (N=4 < row_tile: exercises a single partial block, masked in-kernel)
    logits_2d = jax.random.normal(k1, (BS, I), dtype=jnp.float32)
    target_1d = jax.random.randint(k2, (BS,), 0, I, dtype=jnp.int32)
    target_1d = target_1d.at[0].set(PAD_TOKEN_ID)            # one ignored row
    loss_a = single_target_cross_entropy_loss(target_1d, logits_2d)
    jax.block_until_ready(loss_a)
    ref_a = _reference_loss(target_1d, logits_2d)

    # case 2: target per sequence step -> target [BS, S], logits [BS, S, I]
    logits_3d = jax.random.normal(k3, (BS, S, I), dtype=jnp.float32)
    target_2d = jax.random.randint(k4, (BS, S), 0, I, dtype=jnp.int32)
    target_2d = target_2d.at[:, -1].set(PAD_TOKEN_ID)        # ignored positions
    loss_b = single_target_cross_entropy_loss(target_2d, logits_3d)
    jax.block_until_ready(loss_b)
    ref_b = _reference_loss(target_2d, logits_3d)

    # case 3: enough rows for a 2-block 'parallel' grid with a PARTIAL last
    # logits block (2620 rows, tile 1312) and no wrapper padding of the logits
    B3, S3 = 131, 20                                         # 2620 rows
    logits_c = jax.random.normal(k5, (B3, S3, I), dtype=jnp.float32)
    target_c = jax.random.randint(k6, (B3, S3), 0, I, dtype=jnp.int32)
    target_c = target_c.at[:, 0].set(PAD_TOKEN_ID)
    loss_c = single_target_cross_entropy_loss(target_c, logits_c)
    jax.block_until_ready(loss_c)
    ref_c = _reference_loss(target_c, logits_c)

    # case 4: bf16 logits (DMA stays bf16, bf16 max/gather paths), non-128 vocab
    B4, S4, I4 = 6, 5, 200
    logits_d = jax.random.normal(k7, (B4, S4, I4), dtype=jnp.bfloat16)
    target_d = jax.random.randint(k8, (B4, S4), 0, I4, dtype=jnp.int32)
    target_d = target_d.at[:, -1].set(PAD_TOKEN_ID)
    loss_d = single_target_cross_entropy_loss(target_d, logits_d)
    jax.block_until_ready(loss_d)
    ref_d = _reference_loss(target_d, logits_d)

    assert jnp.allclose(loss_a, ref_a, rtol=1e-5, atol=2e-5), (loss_a, ref_a)
    assert jnp.allclose(loss_b, ref_b, rtol=1e-5, atol=2e-5), (loss_b, ref_b)
    assert jnp.allclose(loss_c, ref_c, rtol=1e-5, atol=2e-5), (loss_c, ref_c)
    assert jnp.allclose(loss_d, ref_d, rtol=1e-5, atol=2e-5), (loss_d, ref_d)

    print("KERNEL_OK")
</pallas_src>

<mosaic_0001>
module attributes {stable_mosaic.version = 11 : i64} {
  func.func @_ce_partial_kernel(%arg0: i32, %arg1: memref<8x1xi32, #tpu.memory_space<vmem>>, %arg2: memref<8x128xf32, #tpu.memory_space<vmem>>, %arg3: memref<8x128xf32, #tpu.memory_space<vmem>>) attributes {dimension_semantics = [#tpu.dimension_semantics<parallel>], iteration_bounds = array<i64: 1>, scalar_prefetch = 0 : i64, scratch_operands = 0 : i64, tpu.core_type = #tpu.core_type<tc>, window_params = [{transform_indices = @transform_0, window_bounds = array<i64: 8, 1>}, {transform_indices = @transform_1, window_bounds = array<i64: 8, 128>}, {transform_indices = @transform_2, window_bounds = array<i64: 8, 128>}]} {
    %c0 = arith.constant 0 : index
    %c0_0 = arith.constant 0 : index
    %0 = vector.load %arg2[%c0, %c0_0] : memref<8x128xf32, #tpu.memory_space<vmem>>, vector<8x128xf32>
    %c0_1 = arith.constant 0 : index
    %c0_2 = arith.constant 0 : index
    %1 = vector.load %arg1[%c0_1, %c0_2] : memref<8x1xi32, #tpu.memory_space<vmem>>, vector<8x1xi32>
    %cst = arith.constant dense<0xFF800000> : vector<8xf32>
    %2 = vector.multi_reduction <maximumf>, %0, %cst [1] : vector<8x128xf32> to vector<8xf32>
    %3 = vector.shape_cast %2 : vector<8xf32> to vector<8x1xf32>
    %4 = vector.broadcast %3 : vector<8x1xf32> to vector<8x128xf32>
    %5 = arith.subf %0, %4 : vector<8x128xf32>
    %6 = math.exp %5 : vector<8x128xf32>
    %cst_3 = arith.constant dense<0.000000e+00> : vector<8xf32>
    %7 = vector.multi_reduction <add>, %6, %cst_3 [1] : vector<8x128xf32> to vector<8xf32>
    %8 = vector.shape_cast %7 : vector<8xf32> to vector<8x1xf32>
    %9 = tpu.iota {dimensions = array<i32: 1>} : vector<1x128xi32>
    %10 = vector.broadcast %9 : vector<1x128xi32> to vector<8x128xi32>
    %11 = vector.broadcast %1 : vector<8x1xi32> to vector<8x128xi32>
    %12 = arith.cmpi eq, %10, %11 : vector<8x128xi32>
    %c0_i32 = arith.constant 0 : i32
    %13 = arith.sitofp %c0_i32 : i32 to f32
    %14 = vector.broadcast %13 : f32 to vector<8x128xf32>
    %15 = arith.select %12, %0, %14 : vector<8x128xi1>, vector<8x128xf32>
    %cst_4 = arith.constant dense<0.000000e+00> : vector<8xf32>
    %16 = vector.multi_reduction <add>, %15, %cst_4 [1] : vector<8x128xf32> to vector<8xf32>
    %17 = vector.shape_cast %16 : vector<8xf32> to vector<8x1xf32>
    %18 = arith.subf %17, %3 : vector<8x1xf32>
    %19 = math.log %8 : vector<8x1xf32>
    %20 = arith.subf %19, %18 : vector<8x1xf32>
    %c0_i32_5 = arith.constant 0 : i32
    %21 = vector.broadcast %c0_i32_5 : i32 to vector<8x1xi32>
    %22 = arith.cmpi ne, %1, %21 : vector<8x1xi32>
    %cst_6 = arith.constant 0.000000e+00 : f32
    %23 = vector.broadcast %cst_6 : f32 to vector<8x1xf32>
    %24 = arith.select %22, %20, %23 : vector<8x1xi1>, vector<8x1xf32>
    %25 = vector.shape_cast %24 : vector<8x1xf32> to vector<1x8x1xf32>
    %cst_7 = arith.constant dense<0.000000e+00> : vector<1xf32>
    %26 = vector.multi_reduction <add>, %25, %cst_7 [1, 2] : vector<1x8x1xf32> to vector<1xf32>
    %27 = vector.shape_cast %26 : vector<1xf32> to vector<1x1x1xf32>
    %28 = vector.extract %27[0, 0, 0] : f32 from vector<1x1x1xf32>
    %29 = arith.extui %22 : vector<8x1xi1> to vector<8x1xi32>
    %30 = arith.sitofp %29 : vector<8x1xi32> to vector<8x1xf32>
    %31 = vector.shape_cast %30 : vector<8x1xf32> to vector<1x8x1xf32>
    %cst_8 = arith.constant dense<0.000000e+00> : vector<1xf32>
    %32 = vector.multi_reduction <add>, %31, %cst_8 [1, 2] : vector<1x8x1xf32> to vector<1xf32>
    %33 = vector.shape_cast %32 : vector<1xf32> to vector<1x1x1xf32>
    %34 = vector.extract %33[0, 0, 0] : f32 from vector<1x1x1xf32>
    %35 = tpu.iota {dimensions = array<i32: 1>} : vector<8x128xi32>
    %c0_i32_9 = arith.constant 0 : i32
    %36 = vector.broadcast %c0_i32_9 : i32 to vector<8x128xi32>
    %37 = arith.cmpi eq, %35, %36 : vector<8x128xi32>
    %c1_i32 = arith.constant 1 : i32
    %38 = vector.broadcast %c1_i32 : i32 to vector<8x128xi32>
    %39 = arith.cmpi eq, %35, %38 : vector<8x128xi32>
    %cst_10 = arith.constant 0.000000e+00 : f32
    %40 = vector.broadcast %34 : f32 to vector<8x128xf32>
    %41 = vector.broadcast %cst_10 : f32 to vector<8x128xf32>
    %42 = arith.select %39, %40, %41 : vector<8x128xi1>, vector<8x128xf32>
    %43 = vector.broadcast %28 : f32 to vector<8x128xf32>
    %44 = arith.select %37, %43, %42 : vector<8x128xi1>, vector<8x128xf32>
    %c0_11 = arith.constant 0 : index
    %c0_12 = arith.constant 0 : index
    %45 = vector.load %arg3[%c0_11, %c0_12] : memref<8x128xf32, #tpu.memory_space<vmem>>, vector<8x128xf32>
    tpu.vector_store %arg3[%c0_11, %c0_12], %44 {strides = array<i32>} : memref<8x128xf32, #tpu.memory_space<vmem>>, vector<8x128xf32>,
    return
  }
  func.func @transform_0(%arg0: i32) -> (i32, i32) {
    %c0_i32 = arith.constant 0 : i32
    %c0_i32_0 = arith.constant 0 : i32
    return %arg0, %c0_i32 : i32, i32
  }
  func.func @transform_1(%arg0: i32) -> (i32, i32) {
    %c0_i32 = arith.constant 0 : i32
    %c0_i32_0 = arith.constant 0 : i32
    return %arg0, %c0_i32 : i32, i32
  }
  func.func @transform_2(%arg0: i32) -> (i32, i32) {
    %c0_i32 = arith.constant 0 : i32
    %c0_i32_0 = arith.constant 0 : i32
    return %arg0, %c0_i32 : i32, i32
  }
}

</mosaic_0001>

<llo_original>
// kernel: tpu_custom_call.1
$region0: #{tpu_custom_call.1}
  #allocation0 [shape = 'u32[]', space=smem, size = 0x4, offset = 0x4, fixed_abs, tag = 'smem constant byte address 0x4 - core index']
  #allocation1 [shape = 'u32[144,128]{1,0:T(1,128)}', space=vmem, size = 0x12000, scoped, tag = 'internal scratch']
  %s0 = inlined_call_operand.vmem [shape: s32[8,1], index: 0, kind: input, shape index: {}]
  %s1 = inlined_call_operand.vmem [shape: f32[4,128], index: 1, kind: input, shape index: {}]
  %s2 = inlined_call_operand.hbm [shape: f32[8,128], index: 2, kind: output, shape index: {}]
  %s3 = sld [smem:[#allocation0]]
  $region18: #{tpu_custom_call.1} parent=0
    _
  %s5 = ssub.s32 1, %s3
  %s6 = scalar_select 0, %s5, %s3
  $region1: #{tpu_custom_call.1} parent=0
    #allocation2 [shape = 'u8[4096]{0}', space=vmem, size = 0x1000, scoped, tag = 'output window, operand 0, single buffered']
    #allocation3 [shape = 's32[1]{0}', space=sflag, size = 0x4, scoped, tag = 'scoped memory for tpu_custom_call.1']
    %7 = vsyncpa [#allocation3], 0
    // Predicated region
    $region2: #{tpu_custom_call.1} parent=1 // pred_check
      _
    $region3: #{tpu_custom_call.1} parent=1 // pred_check_branch
      %9 = sbr.rel (0) target = $region5
    $region4: #{tpu_custom_call.1} parent=1 // pred_region
      _
    $region5: #{tpu_custom_call.1} parent=1 // pred_fallthru
      _
    // Predicated region
    $region6: #{tpu_custom_call.1} parent=1 // pred_check
      _
    $region7: #{tpu_custom_call.1} parent=1 // pred_check_branch
      %11 = sbr.rel (0) target = $region9
    $region8: #{tpu_custom_call.1} parent=1 // pred_region
      _
    $region9: #{tpu_custom_call.1} parent=1 // pred_fallthru
      _
    %v12 = vld [vmem:[%s1] sm:$0xff]
    %v13 = vld [vmem:[%s0] sm:$0xff]
    %14 = vmax.xlane.f32.xlu0 %v12
    %v15 = vpop.xlane.xlu0 %14
    %v16 = vsub.f32 %v12, %v15
    %v17 = vmul.f32 %v16, 1.442695
    %v18 = vpow.pop %v17
    %19 = vadd.xlane.f32.xlu0 %v18
    %v20 = vpop.xlane.xlu0 %19
    %v21 = vlaneseq
    %v22 = vand.u32 %v21, 127
    %23 = vset.pattern.permute.xlu0 0
    %24 = vperm.xlu0 %23, %v13
    %v25 = vpop.permute.xlu0 %24
    %vm26 = vcmp.eq.s32.totalorder %v22, %v25
    %v27 = vsel %vm26, %v12, 0.0
    %28 = vadd.xlane.f32.xlu0 %v27
    %v29 = vpop.xlane.xlu0 %28
    %v30 = vsub.f32 %v29, %v15
    %v31 = vlog2.pop %v20
    %v32 = vmul.f32 %v31, 0.6931472
    %v33 = vsub.f32 %v32, %v30
    %vm34 = vcmp.ne.s32.totalorder %v13, 0
    %v35 = vsel %vm34, %v33, 0.0
    %vm36 = vcmask 7168
    %v37 = vsel %vm36, %v35, 0.0
    %38 = vadd.xlane.f32.xlu0 %v37
    %v39 = vpop.xlane.xlu0 %38
    %v40 = vrot.slane %v39, 4
    %v41 = vadd.f32 %v39, %v40
    %v42 = vrot.slane %v41, 2
    %v43 = vadd.f32 %v41, %v42
    %v44 = vrot.slane %v43, 1
    %v45 = vadd.f32 %v43, %v44
    %s46 = vtos %v45
    %v47 = vsel %vm34, 1, 0
    %v48 = vcvt.s32.f32 %v47
    %v49 = vsel %vm36, %v48, 0.0
    %50 = vadd.xlane.f32.xlu0 %v49
    %v51 = vpop.xlane.xlu0 %50
    %v52 = vrot.slane %v51, 4
    %v53 = vadd.f32 %v51, %v52
    %v54 = vrot.slane %v53, 2
    %v55 = vadd.f32 %v53, %v54
    %v56 = vrot.slane %v55, 1
    %v57 = vadd.f32 %v55, %v56
    %s58 = vtos %v57
    %vm59 = vcmp.eq.s32.totalorder %v22, 0
    %vm60 = vcmp.eq.s32.totalorder %v22, 1
    %v61 = vstv %s58
    %v62 = vsel %vm60, %v61, 0.0
    %v63 = vstv %s46
    %v64 = vsel %vm59, %v63, %v62
    %65 = vst [vmem:[#allocation2] sm:$0xff] %v64
    // Predicated region
    $region10: #{tpu_custom_call.1} parent=1 // pred_check
      _
    $region11: #{tpu_custom_call.1} parent=1 // pred_check_branch
      %67 = sbr.rel (0) target = $region13
    $region12: #{tpu_custom_call.1} parent=1 // pred_region
      %s69 = ssub.s32 128, 128
      %70 = vsyncadd [#allocation3], %s69
      %s72 = sshll.u32 [#allocation2], 4
      %s73 = int_to_ptr.vmem [resolvable:$true] %s72
      %75 = dma.vmem_to_hbm [thread:$0]  %s73, 128, %s2, [#allocation3]
    $region13: #{tpu_custom_call.1} parent=1 // pred_fallthru
      _
    // Predicated region
    $region14: #{tpu_custom_call.1} parent=1 // pred_check
      _
    $region15: #{tpu_custom_call.1} parent=1 // pred_check_branch
      %77 = sbr.rel (0) target = $region17
    $region16: #{tpu_custom_call.1} parent=1 // pred_region
      %78 = dma.done [#allocation3], 128
    $region17: #{tpu_custom_call.1} parent=1 // pred_fallthru
      _
    %79 = vsyncpa [#allocation3], 1

</llo_original>
